<compile_context>
chip_gen: v7x
topology: tpu7x:2x2x1
jax: 0.10.0
libtpu: 0.0.40
codegen_flags: <defaults>
</compile_context>

<pallas_src>
import functools

import jax
import jax.numpy as jnp
from jax.experimental import pallas as pl
from jax.experimental.pallas import tpu as pltpu


def _make_kernel(HW, softmax_temp, window_type, window_width):
    """Build the Pallas kernel body (all parameters are static)."""
    inv_temp = 1.0 / float(softmax_temp)
    hwidth = float(window_width) / 2.0
    inv_hwidth = (1.0 / hwidth) if hwidth != 0.0 else 0.0

    def kernel(x_ref, grid_ref, m_ref, o_ref):
        xb = x_ref[0].astype(jnp.float32)                 # (Cb, HW), lane-dense

        # --- 2D softmax numerator (denominator cancels after renormalization) ---
        xs = xb if softmax_temp == 1.0 else xb * inv_temp
        mx = jnp.max(xs, axis=1, keepdims=True)           # (Cb, 1)
        e = jnp.exp(xs - mx)                              # (Cb, HW)

        if window_type is None:
            num = e                                       # identity window: skip win entirely
        else:
            ws = grid_ref[0:1, :]                         # (1, HW) x (column) coordinate
            hs = grid_ref[1:2, :]                         # (1, HW) y (row) coordinate

            # int32 first-argmax over the flattened spatial axis (exact for any H*W)
            flat = jax.lax.broadcasted_iota(jnp.int32, (1, HW), 1)
            xmax = jnp.max(xb, axis=1, keepdims=True)
            cand = jnp.where(xb >= xmax, flat, HW)        # int32
            argflat = jnp.min(cand, axis=1, keepdims=True)  # (Cb, 1) first max
            sel = flat == argflat                         # exactly one True per channel
            ax = jnp.sum(jnp.where(sel, ws, 0.0), axis=1, keepdims=True)  # (Cb, 1)
            ay = jnp.sum(jnp.where(sel, hs, 0.0), axis=1, keepdims=True)  # (Cb, 1)

            dx = ws - ax
            dy = hs - ay
            dist2 = dx * dx + dy * dy
            if window_type == "Uniform":
                # squared-distance compare: no sqrt needed
                win = (dist2 <= hwidth * hwidth).astype(jnp.float32)
            elif window_type == "Parzen":
                dists = jnp.sqrt(dist2)
                d = dists * inv_hwidth
                omd = 1.0 - d
                near = dists <= hwidth * 0.5
                tail = (dists > hwidth * 0.5) & (dists <= hwidth)
                win = (jnp.where(near, 1.0 - 6.0 * d * d * omd, 0.0)
                       + jnp.where(tail, 2.0 * omd * omd * omd, 0.0))
            else:
                win = jnp.ones_like(xb)
            num = e * win

        # One MXU matmul gives [sum(num*x_idx), sum(num*y_idx), sum(num), 0...]
        # per channel.  HIGHEST precision keeps f32 accuracy on the reduction.
        res = jnp.dot(num, m_ref[...],
                      precision=jax.lax.Precision.HIGHEST,
                      preferred_element_type=jnp.float32)   # (Cb, 128)

        # Deferred renormalization: only Cb reciprocals instead of Cb*HW divides.
        # (denom >= 1 because the argmax location always carries weight 1.)
        coords = res[:, 0:2] * (1.0 / res[:, 2:3])           # (Cb, 2) = [x, y]
        o_ref[0] = coords.astype(o_ref.dtype)

    return kernel


def _pick_c_block(C, HW, bytes_per_elem=4, target_bytes=2 * 1024 * 1024):
    """Largest channel tile (multiple of 8 dividing C, or full C) whose buffer
    stays under ~2 MiB so a double-buffered block fits default scoped VMEM on
    all generations (v7x included)."""
    if C * HW * bytes_per_elem <= target_bytes or C <= 8:
        return C
    cap = max(8, target_bytes // (HW * bytes_per_elem))
    best = None
    cb = 8
    while cb < C and cb <= cap:
        if C % cb == 0:
            best = cb
        cb += 8
    return best if best is not None else C


@functools.partial(jax.jit, static_argnames=(
    "base_index", "step_size", "window_fn", "window_width", "softmax_temp"))
def soft_argmax_2d(x, *, base_index=0, step_size=1, window_fn=None,
                   window_width=10.0, softmax_temp=1.0):
    """Pallas implementation of SoftArgmax2D.forward. x: (B, C, H, W) -> (B, C, 2)."""
    B, C, H, W = x.shape
    HW = H * W
    xf = x.reshape(B, C, HW)                       # lane-dense spatial axis (free reshape)

    # Channel-invariant coordinate grids, built once on the host side: (2, HW)
    col = jnp.broadcast_to(jnp.arange(W, dtype=jnp.float32)[None, :], (H, W)).reshape(1, HW)
    row = jnp.broadcast_to(jnp.arange(H, dtype=jnp.float32)[:, None], (H, W)).reshape(1, HW)
    grids = jnp.concatenate([col, row], axis=0)    # row 0: x (col) coord, row 1: y (row) coord

    # Static MXU reducer matrix: columns [x_idx, y_idx, ones, 0...0]
    x_idx = float(base_index) + float(step_size) * col[0]
    y_idx = float(base_index) + float(step_size) * row[0]
    M = jnp.zeros((HW, 128), jnp.float32)
    M = M.at[:, 0].set(x_idx).at[:, 1].set(y_idx).at[:, 2].set(1.0)

    c_block = _pick_c_block(C, HW)
    kernel = _make_kernel(HW, float(softmax_temp), window_fn, float(window_width))

    return pl.pallas_call(
        kernel,
        out_shape=jax.ShapeDtypeStruct((B, C, 2), jnp.float32),
        grid=(B, C // c_block),
        in_specs=[
            pl.BlockSpec((1, c_block, HW), lambda b, c: (b, c, 0)),
            pl.BlockSpec((2, HW), lambda b, c: (0, 0)),      # fetched once (constant block)
            pl.BlockSpec((HW, 128), lambda b, c: (0, 0)),    # fetched once (constant block)
        ],
        out_specs=pl.BlockSpec((1, c_block, 2), lambda b, c: (b, c, 0)),
        compiler_params=pltpu.CompilerParams(
            dimension_semantics=("parallel", "parallel")),
    )(xf, grids, M)


# ---------------- pure-JAX reference (mirrors the PyTorch code) ----------------
def soft_argmax_2d_ref(x, *, base_index=0, step_size=1, window_fn=None,
                       window_width=10.0, softmax_temp=1.0):
    B, C, H, W = x.shape
    x = x.astype(jnp.float32)
    argmax = jnp.argmax(x.reshape(B * C, -1), axis=1)
    ax = (argmax % W).astype(jnp.float32)
    ay = jnp.floor(argmax.astype(jnp.float32) / float(W))
    ys = jnp.arange(H, dtype=jnp.float32)[None, :, None]
    xs = jnp.arange(W, dtype=jnp.float32)[None, None, :]
    dists = jnp.sqrt((ys - ay[:, None, None]) ** 2 + (xs - ax[:, None, None]) ** 2)
    hwidth = window_width / 2.0
    if window_fn == "Parzen":
        d = dists / hwidth
        near = (dists <= hwidth / 2.0).astype(jnp.float32)
        tail = ((dists > hwidth / 2.0) & (dists <= hwidth)).astype(jnp.float32)
        windows = near * (1 - 6 * d ** 2 * (1 - d)) + tail * (2 * (1 - d) ** 3)
    elif window_fn == "Uniform":
        windows = (dists <= hwidth).astype(jnp.float32)
    else:
        windows = jnp.ones_like(dists)
    windows = windows.reshape(B, C, H, W)
    sm = jax.nn.softmax(x.reshape(B, C, -1) / softmax_temp, axis=2).reshape(B, C, H, W)
    smax = sm * windows
    smax = smax / jnp.sum(smax.reshape(B, C, -1), axis=2)[:, :, None, None]
    x_idx = (base_index + step_size * jnp.arange(W)).astype(jnp.float32)
    y_idx = (base_index + step_size * jnp.arange(H)).astype(jnp.float32)
    xc = jnp.sum(jnp.sum(smax, axis=2) * x_idx, axis=2)
    yc = jnp.sum(jnp.sum(smax, axis=3) * y_idx, axis=2)
    return jnp.concatenate([xc[..., None], yc[..., None]], axis=2)


if __name__ == "__main__":
    key = jax.random.PRNGKey(0)
    B, C, H, W = 2, 4, 16, 16
    x = jax.random.normal(key, (B, C, H, W), dtype=jnp.float32) * 3.0

    # Default configuration (window_fn=None -> identity window).
    out = jax.block_until_ready(soft_argmax_2d(x))
    ref = soft_argmax_2d_ref(x)
    assert out.shape == (B, C, 2)
    assert jnp.allclose(out, ref, rtol=1e-4, atol=1e-4), (out, ref)

    # Parzen window + temperature.
    out_p = jax.block_until_ready(
        soft_argmax_2d(x, window_fn="Parzen", window_width=10.0, softmax_temp=0.5))
    ref_p = soft_argmax_2d_ref(x, window_fn="Parzen", window_width=10.0, softmax_temp=0.5)
    assert jnp.allclose(out_p, ref_p, rtol=1e-4, atol=1e-4), (out_p, ref_p)

    # Uniform window.
    out_u = jax.block_until_ready(
        soft_argmax_2d(x, window_fn="Uniform", window_width=6.0))
    ref_u = soft_argmax_2d_ref(x, window_fn="Uniform", window_width=6.0)
    assert jnp.allclose(out_u, ref_u, rtol=1e-4, atol=1e-4), (out_u, ref_u)

    # Non-default base_index / step_size.
    out_b = jax.block_until_ready(soft_argmax_2d(x, base_index=2, step_size=3))
    ref_b = soft_argmax_2d_ref(x, base_index=2, step_size=3)
    assert jnp.allclose(out_b, ref_b, rtol=1e-4, atol=1e-4), (out_b, ref_b)

    print("KERNEL_OK")
</pallas_src>

<mosaic_0001>
module attributes {stable_mosaic.version = 11 : i64} {
  func.func @kernel(%arg0: i32, %arg1: i32, %arg2: memref<1x4x256xf32, #tpu.memory_space<vmem>>, %arg3: memref<2x256xf32, #tpu.memory_space<vmem>>, %arg4: memref<256x128xf32, #tpu.memory_space<vmem>>, %arg5: memref<1x4x2xf32, #tpu.memory_space<vmem>>) attributes {dimension_semantics = [#tpu.dimension_semantics<parallel>, #tpu.dimension_semantics<parallel>], iteration_bounds = array<i64: 2, 1>, scalar_prefetch = 0 : i64, scratch_operands = 0 : i64, tpu.core_type = #tpu.core_type<tc>, window_params = [{transform_indices = @transform_0, window_bounds = array<i64: 1, 4, 256>}, {pipeline_mode = #tpu.pipeline_mode<synchronous>, transform_indices = @transform_1, window_bounds = array<i64: 2, 256>}, {pipeline_mode = #tpu.pipeline_mode<synchronous>, transform_indices = @transform_2, window_bounds = array<i64: 256, 128>}, {transform_indices = @transform_3, window_bounds = array<i64: 1, 4, 2>}]} {
    %c0 = arith.constant 0 : index
    %c0_0 = arith.constant 0 : index
    %c0_1 = arith.constant 0 : index
    %0 = vector.load %arg2[%c0, %c0_0, %c0_1] : memref<1x4x256xf32, #tpu.memory_space<vmem>>, vector<1x4x256xf32>
    %1 = vector.shape_cast %0 : vector<1x4x256xf32> to vector<4x256xf32>
    %cst = arith.constant dense<0xFF800000> : vector<4xf32>
    %2 = vector.multi_reduction <maximumf>, %1, %cst [1] : vector<4x256xf32> to vector<4xf32>
    %3 = vector.shape_cast %2 : vector<4xf32> to vector<4x1xf32>
    %4 = vector.broadcast %3 : vector<4x1xf32> to vector<4x256xf32>
    %5 = arith.subf %1, %4 : vector<4x256xf32>
    %6 = math.exp %5 : vector<4x256xf32>
    %c0_2 = arith.constant 0 : index
    %c0_3 = arith.constant 0 : index
    %7 = vector.load %arg4[%c0_2, %c0_3] : memref<256x128xf32, #tpu.memory_space<vmem>>, vector<256x128xf32>
    %cst_4 = arith.constant dense<0.000000e+00> : vector<4x128xf32>
    %8 = tpu.matmul %6, %7, %cst_4 {dimension_numbers = #tpu.dot_dimension_numbers<[1], [0], [0], [1], [0, 0, 1, 1], [], []>, precision = #tpu.contract_precision<fp32>} : vector<4x256xf32>, vector<256x128xf32>, vector<4x128xf32> -> vector<4x128xf32>
    %9 = vector.extract_strided_slice %8 {offsets = [0, 0], sizes = [4, 2], strides = [1, 1]} : vector<4x128xf32> to vector<4x2xf32>
    %10 = vector.extract_strided_slice %8 {offsets = [0, 2], sizes = [4, 1], strides = [1, 1]} : vector<4x128xf32> to vector<4x1xf32>
    %cst_5 = arith.constant 1.000000e+00 : f32
    %11 = vector.broadcast %cst_5 : f32 to vector<4x1xf32>
    %12 = arith.divf %11, %10 : vector<4x1xf32>
    %13 = vector.broadcast %12 : vector<4x1xf32> to vector<4x2xf32>
    %14 = arith.mulf %9, %13 : vector<4x2xf32>
    %c0_6 = arith.constant 0 : index
    %c0_7 = arith.constant 0 : index
    %c0_8 = arith.constant 0 : index
    %15 = vector.load %arg5[%c0_6, %c0_7, %c0_8] : memref<1x4x2xf32, #tpu.memory_space<vmem>>, vector<1x4x2xf32>
    %16 = vector.shape_cast %15 : vector<1x4x2xf32> to vector<4x2xf32>
    %17 = vector.shape_cast %14 : vector<4x2xf32> to vector<1x4x2xf32>
    tpu.vector_store %arg5[%c0_6, %c0_7, %c0_8], %17 {strides = array<i32>} : memref<1x4x2xf32, #tpu.memory_space<vmem>>, vector<1x4x2xf32>,
    return
  }
  func.func @transform_0(%arg0: i32, %arg1: i32) -> (i32, i32, i32) {
    %c0_i32 = arith.constant 0 : i32
    %c0_i32_0 = arith.constant 0 : i32
    return %arg0, %arg1, %c0_i32 : i32, i32, i32
  }
  func.func @transform_1(%arg0: i32, %arg1: i32) -> (i32, i32) {
    %c0_i32 = arith.constant 0 : i32
    %c0_i32_0 = arith.constant 0 : i32
    %c0_i32_1 = arith.constant 0 : i32
    return %c0_i32, %c0_i32_0 : i32, i32
  }
  func.func @transform_2(%arg0: i32, %arg1: i32) -> (i32, i32) {
    %c0_i32 = arith.constant 0 : i32
    %c0_i32_0 = arith.constant 0 : i32
    %c0_i32_1 = arith.constant 0 : i32
    return %c0_i32, %c0_i32_0 : i32, i32
  }
  func.func @transform_3(%arg0: i32, %arg1: i32) -> (i32, i32, i32) {
    %c0_i32 = arith.constant 0 : i32
    %c0_i32_0 = arith.constant 0 : i32
    return %arg0, %arg1, %c0_i32 : i32, i32, i32
  }
}

</mosaic_0001>

<llo_original>
// kernel: soft_argmax_2d.1
$region0: #{soft_argmax_2d.1}
  #allocation0 [shape = 'u32[]', space=smem, size = 0x4, offset = 0x4, fixed_abs, tag = 'smem constant byte address 0x4 - core index']
  #allocation1 [shape = 'u32[144,128]{1,0:T(1,128)}', space=vmem, size = 0x12000, scoped, tag = 'internal scratch']
  %s0 = inlined_call_operand.vmem [shape: f32[2,4,256], index: 0, kind: input, shape index: {}]
  %s1 = inlined_call_operand.vmem [shape: f32[2,256], index: 1, kind: input, shape index: {}]
  %s2 = inlined_call_operand.vmem [shape: f32[256,128], index: 2, kind: input, shape index: {}]
  %s3 = inlined_call_operand.vmem [shape: f32[2,4,2], index: 3, kind: output, shape index: {}]
  %s4 = sld [smem:[#allocation0]]
  $region45: #{soft_argmax_2d.1} parent=0
    _
  %s6 = ssub.s32 1, %s4
  %s7 = scalar_select 0, %s6, %s4
  loop: start=0, step=1, limit=4
  $region2: #{soft_argmax_2d.1} parent=0 // loop_pre_header
    _
  $region3: #{soft_argmax_2d.1} parent=0 // loop_header
    %s9 = sphi 0, %s13
    %p10 = scmp.ge.s32.totalorder %s9, 4
    %s16 = sphi 0, %s28
    %s17 = sphi 0, %s24
    %s18 = sphi 0, %s16
    %s19 = sphi 0, %s17
    %s20 = sphi 0, %s18
    %s21 = sphi 0, %s19
    %s33 = sphi 0, %s35
    %s36 = sphi 0, %s33
    %s37 = sphi 0, %s36
    %s53 = sphi 0, %s37
    %s57 = sphi 0, %s57
    %s59 = sphi 0, %s57
    %s60 = sphi 0, %s59
    %s74 = sphi 0, %s60
    %s78 = sphi 0, %s78
    %s80 = sphi 0, %s78
    %s81 = sphi 0, %s80
    %s95 = sphi 0, %s81
    %s103 = sphi 0, %s105
    %s106 = sphi 0, %s103
    %s107 = sphi 0, %s106
    %s123 = sphi 0, %s107
  $region4: #{soft_argmax_2d.1} parent=0 // loop_header_branch
    %12 = sbr.rel (%p10) target = $region8
  $region5: #{soft_argmax_2d.1} parent=0 // loop_body
    %s14 = ssub.s32 %s9, 1
    %s15 = ssub.s32 %s9, 2
    %s22 = sadd.s32 1, %s17
    %p23 = scmp.ge.s32.totalorder %s22, 1
    %s24 = scalar_select %p23, 0, %s22
    %s25 = sadd.s32 1, %s16
    %s26 = scalar_select %p23, %s25, %s16
    %p27 = scmp.ge.s32.totalorder %s26, 2
    %s28 = scalar_select %p27, 0, %s26
    %s29 = ssub.s32 %s16, %s28
    %s30 = ssub.s32 %s17, %s24
    %s31 = sor.u32 %s29, %s30
    %p32 = scmp.eq.s32.totalorder %s31, 0
    %s34 = sadd.s32 %s33, 1
    %s35 = scalar_select %p32, %s33, %s34
    %p38 = pneg %p32
    %p39 = scmp.eq.s32.totalorder %s9, 1
    %p40 = por %p38, %p39
    %p41 = scmp.ne.s32.totalorder %s33, %s36
    %p42 = scmp.eq.s32.totalorder %s9, 0
    %p43 = por %p41, %p42
    %p44 = scmp.ne.s32.totalorder %s33, %s36
    %p45 = scmp.eq.s32.totalorder %s14, 1
    %p46 = por %p44, %p45
    %p47 = scmp.ne.s32.totalorder %s36, %s37
    %p48 = scmp.eq.s32.totalorder %s14, 0
    %p49 = por %p47, %p48
    %p50 = scmp.ne.s32.totalorder %s36, %s37
    %p51 = scmp.eq.s32.totalorder %s15, 1
    %p52 = por %p50, %p51
    %p54 = scmp.ne.s32.totalorder %s37, %s53
    %p55 = scmp.eq.s32.totalorder %s15, 0
    %p56 = por %p54, %p55
    %s58 = sadd.s32 %s57, 1
    %p61 = scmp.eq.s32.totalorder %s9, 1
    %p62 = scmp.ne.s32.totalorder %s57, %s59
    %p63 = scmp.eq.s32.totalorder %s9, 0
    %p64 = por %p62, %p63
    %p65 = scmp.ne.s32.totalorder %s57, %s59
    %p66 = scmp.eq.s32.totalorder %s14, 1
    %p67 = por %p65, %p66
    %p68 = scmp.ne.s32.totalorder %s59, %s60
    %p69 = scmp.eq.s32.totalorder %s14, 0
    %p70 = por %p68, %p69
    %p71 = scmp.ne.s32.totalorder %s59, %s60
    %p72 = scmp.eq.s32.totalorder %s15, 1
    %p73 = por %p71, %p72
    %p75 = scmp.ne.s32.totalorder %s60, %s74
    %p76 = scmp.eq.s32.totalorder %s15, 0
    %p77 = por %p75, %p76
    %s79 = sadd.s32 %s78, 1
    %p82 = scmp.eq.s32.totalorder %s9, 1
    %p83 = scmp.ne.s32.totalorder %s78, %s80
    %p84 = scmp.eq.s32.totalorder %s9, 0
    %p85 = por %p83, %p84
    %p86 = scmp.ne.s32.totalorder %s78, %s80
    %p87 = scmp.eq.s32.totalorder %s14, 1
    %p88 = por %p86, %p87
    %p89 = scmp.ne.s32.totalorder %s80, %s81
    %p90 = scmp.eq.s32.totalorder %s14, 0
    %p91 = por %p89, %p90
    %p92 = scmp.ne.s32.totalorder %s80, %s81
    %p93 = scmp.eq.s32.totalorder %s15, 1
    %p94 = por %p92, %p93
    %p96 = scmp.ne.s32.totalorder %s81, %s95
    %p97 = scmp.eq.s32.totalorder %s15, 0
    %p98 = por %p96, %p97
    %s99 = ssub.s32 %s16, %s28
    %s100 = ssub.s32 %s17, %s24
    %s101 = sor.u32 %s99, %s100
    %p102 = scmp.eq.s32.totalorder %s101, 0
    %s104 = sadd.s32 %s103, 1
    %s105 = scalar_select %p102, %s103, %s104
    %p108 = pneg %p102
    %p109 = scmp.eq.s32.totalorder %s9, 1
    %p110 = por %p108, %p109
    %p111 = scmp.ne.s32.totalorder %s103, %s106
    %p112 = scmp.eq.s32.totalorder %s9, 0
    %p113 = por %p111, %p112
    %p114 = scmp.ne.s32.totalorder %s103, %s106
    %p115 = scmp.eq.s32.totalorder %s14, 1
    %p116 = por %p114, %p115
    %p117 = scmp.ne.s32.totalorder %s106, %s107
    %p118 = scmp.eq.s32.totalorder %s14, 0
    %p119 = por %p117, %p118
    %p120 = scmp.ne.s32.totalorder %s106, %s107
    %p121 = scmp.eq.s32.totalorder %s15, 1
    %p122 = por %p120, %p121
    %p124 = scmp.ne.s32.totalorder %s107, %s123
    %p125 = scmp.eq.s32.totalorder %s15, 0
    %p126 = por %p124, %p125
    %p127 = scmp.le.s32.totalorder 1, %s9
    %p128 = scmp.lt.s32.totalorder %s9, 3
    %p129 = pnand %p127, %p128
    %p130 = pneg %p129
    // Predicated region
    $region9: #{soft_argmax_2d.1} parent=5 // pred_check
      _
    $region10: #{soft_argmax_2d.1} parent=5 // pred_check_branch
      %132 = sbr.rel (%p129) target = $region12
    $region11: #{soft_argmax_2d.1} parent=5 // pred_region
      %s133 = ssub.s32 %s9, 1
      // Predicated region
      $region13: #{soft_argmax_2d.1} parent=11 // pred_check
        %p134 = pneg %p70
      $region14: #{soft_argmax_2d.1} parent=11 // pred_check_branch
        %136 = sbr.rel (%p134) target = $region16
      $region15: #{soft_argmax_2d.1} parent=11 // pred_region
        _
      $region16: #{soft_argmax_2d.1} parent=11 // pred_fallthru
        _
      // Predicated region
      $region17: #{soft_argmax_2d.1} parent=11 // pred_check
        %p137 = pneg %p91
      $region18: #{soft_argmax_2d.1} parent=11 // pred_check_branch
        %139 = sbr.rel (%p137) target = $region20
      $region19: #{soft_argmax_2d.1} parent=11 // pred_region
        _
      $region20: #{soft_argmax_2d.1} parent=11 // pred_fallthru
        _
    $region12: #{soft_argmax_2d.1} parent=5 // pred_fallthru
      _
    %p140 = scmp.lt.s32.totalorder %s9, 2
    // Predicated region
    $region21: #{soft_argmax_2d.1} parent=5 // pred_check
      %p141 = pneg %p140
    $region22: #{soft_argmax_2d.1} parent=5 // pred_check_branch
      %143 = sbr.rel (%p141) target = $region24
    $region23: #{soft_argmax_2d.1} parent=5 // pred_region
      // Predicated region
      $region25: #{soft_argmax_2d.1} parent=23 // pred_check
        %p144 = pneg %p43
      $region26: #{soft_argmax_2d.1} parent=23 // pred_check_branch
        %146 = sbr.rel (%p144) target = $region28
      $region27: #{soft_argmax_2d.1} parent=23 // pred_region
        %p147 = scmp.lt.s32.totalorder %s16, 1
        %s148 = scalar_select %p147, %s16, 1
        %p149 = scmp.lt.s32.totalorder %s17, 0
        %s150 = scalar_select %p149, %s17, 0
        %s151 = smul.addr %s150, 2
        %s152 = smul.addr %s148, 2
        %s153 = sadd.s32 %s151, %s152
        %s154 = smul.addr %s153, 4
        %s155 = scalar_lea.vmem %s0, %s154
      $region28: #{soft_argmax_2d.1} parent=23 // pred_fallthru
        _
    $region24: #{soft_argmax_2d.1} parent=5 // pred_fallthru
      _
    %p156 = scmp.le.s32.totalorder 1, %s9
    %p157 = scmp.lt.s32.totalorder %s9, 3
    %p158 = pnand %p156, %p157
    %p159 = pneg %p158
    // Predicated region
    $region29: #{soft_argmax_2d.1} parent=5 // pred_check
      _
    $region30: #{soft_argmax_2d.1} parent=5 // pred_check_branch
      %161 = sbr.rel (%p158) target = $region32
    $region31: #{soft_argmax_2d.1} parent=5 // pred_region
      %s162 = ssub.s32 %s9, 1
      %p163 = scmp.lt.s32.totalorder %s18, 1
      %s164 = scalar_select %p163, %s18, 1
      %p165 = scmp.lt.s32.totalorder %s19, 0
      %s166 = scalar_select %p165, %s19, 0
      %s167 = smul.addr %s166, 2
      %s168 = smul.addr %s164, 2
      %s169 = sadd.s32 %s167, %s168
      %s170 = smul.addr %s169, 4
      %s171 = scalar_lea.vmem %s0, %s170
      %p172 = pneg %p49
      %p173 = pneg %p46
      %p174 = pneg %p70
      %p175 = pneg %p67
      %p176 = pneg %p91
      %p177 = pneg %p88
      %p178 = pneg %p119
      %p179 = pneg %p116
      %p180 = scmp.lt.s32.totalorder %s18, 1
      %s181 = scalar_select %p180, %s18, 1
      %p182 = scmp.lt.s32.totalorder %s19, 0
      %s183 = scalar_select %p182, %s19, 0
      %s184 = sadd.s32 %s183, %s181
      %s185 = smul.addr %s184, 4
      %s186 = scalar_lea.vmem %s3, %s185
      %p187 = scmp.lt.s32.totalorder %s18, 1
      %s188 = scalar_select %p187, %s18, 1
      %p189 = scmp.lt.s32.totalorder %s19, 0
      %s190 = scalar_select %p189, %s19, 0
      %s191 = smul.addr %s190, 2
      %s192 = smul.addr %s188, 2
      %s193 = sadd.s32 %s191, %s192
      %s194 = smul.addr %s193, 4
      %s195 = scalar_lea.vmem %s0, %s194
      %p196 = scmp.lt.s32.totalorder %s18, 1
      %s197 = scalar_select %p196, %s18, 1
      %p198 = scmp.lt.s32.totalorder %s19, 0
      %s199 = scalar_select %p198, %s19, 0
      %s200 = sadd.s32 %s199, %s197
      %s201 = smul.addr %s200, 4
      %s202 = scalar_lea.vmem %s3, %s201
      %v203 = vld [vmem:[%s195] sm:$0xff]
      %v205 = vcombine.high %v203, %v203
      %vm207 = vcmask 1043456
      %v208 = vsel %vm207, %v203, -inf
      %v209 = vsel %vm207, %v205, -inf
      %v210 = vmax.f32 %v208, %v209
      %211 = vmax.xlane.f32.xlu0 %v210
      %v212 = vpop.xlane.xlu0 %211
      %v215 = vunpack.c.l.s4 839922192
      %v216 = vunpack.c.0.s8 %v215
      %v217 = vlaneseq
      %v218 = vshrl.u32 %v217, 7
      %v219 = vsub.s32 %v216, %v218
      %v220 = vrot.slane %v212, %v219
      %v222 = vsub.f32 %v203, %v220
      %v223 = vmul.f32 %v222, 1.442695
      %v224 = vpow.pop %v223
      %v225 = vld [vmem:[%s2] sm:$0xff]
      %v226 = vld [vmem:[%s2 + $0x8] sm:$0xff]
      %v227 = vld [vmem:[%s2 + $0x10] sm:$0xff]
      %v228 = vld [vmem:[%s2 + $0x18] sm:$0xff]
      %v229 = vld [vmem:[%s2 + $0x20] sm:$0xff]
      %v230 = vld [vmem:[%s2 + $0x28] sm:$0xff]
      %v231 = vld [vmem:[%s2 + $0x30] sm:$0xff]
      %v232 = vld [vmem:[%s2 + $0x38] sm:$0xff]
      %v233 = vld [vmem:[%s2 + $0x40] sm:$0xff]
      %v234 = vld [vmem:[%s2 + $0x48] sm:$0xff]
      %v235 = vld [vmem:[%s2 + $0x50] sm:$0xff]
      %v236 = vld [vmem:[%s2 + $0x58] sm:$0xff]
      %v237 = vld [vmem:[%s2 + $0x60] sm:$0xff]
      %v238 = vld [vmem:[%s2 + $0x68] sm:$0xff]
      %v239 = vld [vmem:[%s2 + $0x70] sm:$0xff]
      %v240 = vld [vmem:[%s2 + $0x78] sm:$0xff]
      %v241 = vld [vmem:[%s2 + $0x80] sm:$0xff]
      %v242 = vld [vmem:[%s2 + $0x88] sm:$0xff]
      %v243 = vld [vmem:[%s2 + $0x90] sm:$0xff]
      %v244 = vld [vmem:[%s2 + $0x98] sm:$0xff]
      %v245 = vld [vmem:[%s2 + $0xa0] sm:$0xff]
      %v246 = vld [vmem:[%s2 + $0xa8] sm:$0xff]
      %v247 = vld [vmem:[%s2 + $0xb0] sm:$0xff]
      %v248 = vld [vmem:[%s2 + $0xb8] sm:$0xff]
      %v249 = vld [vmem:[%s2 + $0xc0] sm:$0xff]
      %v250 = vld [vmem:[%s2 + $0xc8] sm:$0xff]
      %v251 = vld [vmem:[%s2 + $0xd0] sm:$0xff]
      %v252 = vld [vmem:[%s2 + $0xd8] sm:$0xff]
      %v253 = vld [vmem:[%s2 + $0xe0] sm:$0xff]
      %v254 = vld [vmem:[%s2 + $0xe8] sm:$0xff]
      %v255 = vld [vmem:[%s2 + $0xf0] sm:$0xff]
      %v256 = vld [vmem:[%s2 + $0xf8] sm:$0xff]
      %v258 = vcombine.high %v224, %v224
      %260 = vmatprep.subr.mxu0 0.0
      %v261 = vand.u32 %v225, 4294901760
      %262 = vmatpush1.msra.mxu0 %v261
      %263 = vmatprep.subr.mxu0 0.0
      %v264 = vand.u32 %v226, 4294901760
      %265 = vmatpush1.msra.mxu0 %v264
      %266 = vmatprep.subr.mxu0 0.0
      %v267 = vand.u32 %v227, 4294901760
      %268 = vmatpush1.msra.mxu0 %v267
      %269 = vmatprep.subr.mxu0 0.0
      %v270 = vand.u32 %v228, 4294901760
      %271 = vmatpush1.msra.mxu0 %v270
      %272 = vmatprep.subr.mxu0 0.0
      %v273 = vand.u32 %v229, 4294901760
      %274 = vmatpush1.msra.mxu0 %v273
      %275 = vmatprep.subr.mxu0 0.0
      %v276 = vand.u32 %v230, 4294901760
      %277 = vmatpush1.msra.mxu0 %v276
      %278 = vmatprep.subr.mxu0 0.0
      %v279 = vand.u32 %v231, 4294901760
      %280 = vmatpush1.msra.mxu0 %v279
      %281 = vmatprep.subr.mxu0 0.0
      %v282 = vand.u32 %v232, 4294901760
      %283 = vmatpush1.msra.mxu0 %v282
      %284 = vmatprep.subr.mxu0 0.0
      %v285 = vand.u32 %v233, 4294901760
      %286 = vmatpush1.msra.mxu0 %v285
      %287 = vmatprep.subr.mxu0 0.0
      %v288 = vand.u32 %v234, 4294901760
      %289 = vmatpush1.msra.mxu0 %v288
      %290 = vmatprep.subr.mxu0 0.0
      %v291 = vand.u32 %v235, 4294901760
      %292 = vmatpush1.msra.mxu0 %v291
      %293 = vmatprep.subr.mxu0 0.0
      %v294 = vand.u32 %v236, 4294901760
      %295 = vmatpush1.msra.mxu0 %v294
      %296 = vmatprep.subr.mxu0 0.0
      %v297 = vand.u32 %v237, 4294901760
      %298 = vmatpush1.msra.mxu0 %v297
      %299 = vmatprep.subr.mxu0 0.0
      %v300 = vand.u32 %v238, 4294901760
      %301 = vmatpush1.msra.mxu0 %v300
      %302 = vmatprep.subr.mxu0 0.0
      %v303 = vand.u32 %v239, 4294901760
      %304 = vmatpush1.msra.mxu0 %v303
      %305 = vmatprep.subr.mxu0 0.0
      %v306 = vand.u32 %v240, 4294901760
      %307 = vmatpush1.msra.mxu0 %v306
      %308 = vmatprep.subr.mxu0 0.0
      %v309 = vand.u32 %v241, 4294901760
      %310 = vmatpush1.msra.mxu0 %v309
      %311 = vmatprep.subr.mxu0 0.0
      %v312 = vand.u32 %v242, 4294901760
      %313 = vmatpush1.msra.mxu0 %v312
      %314 = vmatprep.subr.mxu0 0.0
      %v315 = vand.u32 %v243, 4294901760
      %316 = vmatpush1.msra.mxu0 %v315
      %317 = vmatprep.subr.mxu0 0.0
      %v318 = vand.u32 %v244, 4294901760
      %319 = vmatpush1.msra.mxu0 %v318
      %320 = vmatprep.subr.mxu0 0.0
      %v321 = vand.u32 %v245, 4294901760
      %322 = vmatpush1.msra.mxu0 %v321
      %323 = vmatprep.subr.mxu0 0.0
      %v324 = vand.u32 %v246, 4294901760
      %325 = vmatpush1.msra.mxu0 %v324
      %326 = vmatprep.subr.mxu0 0.0
      %v327 = vand.u32 %v247, 4294901760
      %328 = vmatpush1.msra.mxu0 %v327
      %329 = vmatprep.subr.mxu0 0.0
      %v330 = vand.u32 %v248, 4294901760
      %331 = vmatpush1.msra.mxu0 %v330
      %332 = vmatprep.subr.mxu0 0.0
      %v333 = vand.u32 %v249, 4294901760
      %334 = vmatpush1.msra.mxu0 %v333
      %335 = vmatprep.subr.mxu0 0.0
      %v336 = vand.u32 %v250, 4294901760
      %337 = vmatpush1.msra.mxu0 %v336
      %338 = vmatprep.subr.mxu0 0.0
      %v339 = vand.u32 %v251, 4294901760
      %340 = vmatpush1.msra.mxu0 %v339
      %341 = vmatprep.subr.mxu0 0.0
      %v342 = vand.u32 %v252, 4294901760
      %343 = vmatpush1.msra.mxu0 %v342
      %344 = vmatprep.subr.mxu0 0.0
      %v345 = vand.u32 %v253, 4294901760
      %346 = vmatpush1.msra.mxu0 %v345
      %347 = vmatprep.subr.mxu0 0.0
      %v348 = vand.u32 %v254, 4294901760
      %349 = vmatpush1.msra.mxu0 %v348
      %350 = vmatprep.subr.mxu0 0.0
      %v351 = vand.u32 %v255, 4294901760
      %352 = vmatpush1.msra.mxu0 %v351
      %353 = vmatprep.subr.mxu0 0.0
      %v354 = vand.u32 %v256, 4294901760
      %355 = vmatpush1.msra.mxu0 %v354
      %v356 = vand.u32 %v258, 4294901760
      %v357 = vsub.f32 %v258, %v356
      %v358 = vand.u32 %v357, 4294901760
      %v359 = vsub.f32 %v357, %v358
      %v360 = vand.u32 %v359, 4294901760
      %361 = vmatprep.mubr.f32.mxu0 %v360
      %v362 = vand.u32 %v224, 4294901760
      %v363 = vsub.f32 %v224, %v362
      %v364 = vand.u32 %v363, 4294901760
      %v365 = vsub.f32 %v363, %v364
      %v366 = vand.u32 %v365, 4294901760
      %367 = vmatmul.mubr.f32.gmra.mrb[0].mxu0 %v366
      %v368 = vpop.f32.mrb[0].mxu0
      %v369 = vadd.f32 0.0, %v368
      %v370 = vpop.f32.mrb[0].mxu0
      %371 = vdwg.mxu0
      %372 = vmatprep.subr.mxu0 0.0
      %v373 = vand.u32 %v225, 4294901760
      %v374 = vsub.f32 %v225, %v373
      %v375 = vand.u32 %v374, 4294901760
      %v376 = vsub.f32 %v374, %v375
      %v377 = vand.u32 %v376, 4294901760
      %378 = vmatpush1.msra.mxu0 %v377
      %379 = vmatprep.subr.mxu0 0.0
      %v380 = vand.u32 %v226, 4294901760
      %v381 = vsub.f32 %v226, %v380
      %v382 = vand.u32 %v381, 4294901760
      %v383 = vsub.f32 %v381, %v382
      %v384 = vand.u32 %v383, 4294901760
      %385 = vmatpush1.msra.mxu0 %v384
      %386 = vmatprep.subr.mxu0 0.0
      %v387 = vand.u32 %v227, 4294901760
      %v388 = vsub.f32 %v227, %v387
      %v389 = vand.u32 %v388, 4294901760
      %v390 = vsub.f32 %v388, %v389
      %v391 = vand.u32 %v390, 4294901760
      %392 = vmatpush1.msra.mxu0 %v391
      %393 = vmatprep.subr.mxu0 0.0
      %v394 = vand.u32 %v228, 4294901760
      %v395 = vsub.f32 %v228, %v394
      %v396 = vand.u32 %v395, 4294901760
      %v397 = vsub.f32 %v395, %v396
      %v398 = vand.u32 %v397, 4294901760
      %399 = vmatpush1.msra.mxu0 %v398
      %400 = vmatprep.subr.mxu0 0.0
      %v401 = vand.u32 %v229, 4294901760
      %v402 = vsub.f32 %v229, %v401
      %v403 = vand.u32 %v402, 4294901760
      %v404 = vsub.f32 %v402, %v403
      %v405 = vand.u32 %v404, 4294901760
      %406 = vmatpush1.msra.mxu0 %v405
      %407 = vmatprep.subr.mxu0 0.0
      %v408 = vand.u32 %v230, 4294901760
      %v409 = vsub.f32 %v230, %v408
      %v410 = vand.u32 %v409, 4294901760
      %v411 = vsub.f32 %v409, %v410
      %v412 = vand.u32 %v411, 4294901760
      %413 = vmatpush1.msra.mxu0 %v412
      %414 = vmatprep.subr.mxu0 0.0
      %v415 = vand.u32 %v231, 4294901760
      %v416 = vsub.f32 %v231, %v415
      %v417 = vand.u32 %v416, 4294901760
      %v418 = vsub.f32 %v416, %v417
      %v419 = vand.u32 %v418, 4294901760
      %420 = vmatpush1.msra.mxu0 %v419
      %421 = vmatprep.subr.mxu0 0.0
      %v422 = vand.u32 %v232, 4294901760
      %v423 = vsub.f32 %v232, %v422
      %v424 = vand.u32 %v423, 4294901760
      %v425 = vsub.f32 %v423, %v424
      %v426 = vand.u32 %v425, 4294901760
      %427 = vmatpush1.msra.mxu0 %v426
      %428 = vmatprep.subr.mxu0 0.0
      %v429 = vand.u32 %v233, 4294901760
      %v430 = vsub.f32 %v233, %v429
      %v431 = vand.u32 %v430, 4294901760
      %v432 = vsub.f32 %v430, %v431
      %v433 = vand.u32 %v432, 4294901760
      %434 = vmatpush1.msra.mxu0 %v433
      %435 = vmatprep.subr.mxu0 0.0
      %v436 = vand.u32 %v234, 4294901760
      %v437 = vsub.f32 %v234, %v436
      %v438 = vand.u32 %v437, 4294901760
      %v439 = vsub.f32 %v437, %v438
      %v440 = vand.u32 %v439, 4294901760
      %441 = vmatpush1.msra.mxu0 %v440
      %442 = vmatprep.subr.mxu0 0.0
      %v443 = vand.u32 %v235, 4294901760
      %v444 = vsub.f32 %v235, %v443
      %v445 = vand.u32 %v444, 4294901760
      %v446 = vsub.f32 %v444, %v445
      %v447 = vand.u32 %v446, 4294901760
      %448 = vmatpush1.msra.mxu0 %v447
      %449 = vmatprep.subr.mxu0 0.0
      %v450 = vand.u32 %v236, 4294901760
      %v451 = vsub.f32 %v236, %v450
      %v452 = vand.u32 %v451, 4294901760
      %v453 = vsub.f32 %v451, %v452
      %v454 = vand.u32 %v453, 4294901760
      %455 = vmatpush1.msra.mxu0 %v454
      %456 = vmatprep.subr.mxu0 0.0
      %v457 = vand.u32 %v237, 4294901760
      %v458 = vsub.f32 %v237, %v457
      %v459 = vand.u32 %v458, 4294901760
      %v460 = vsub.f32 %v458, %v459
      %v461 = vand.u32 %v460, 4294901760
      %462 = vmatpush1.msra.mxu0 %v461
      %463 = vmatprep.subr.mxu0 0.0
      %v464 = vand.u32 %v238, 4294901760
      %v465 = vsub.f32 %v238, %v464
      %v466 = vand.u32 %v465, 4294901760
      %v467 = vsub.f32 %v465, %v466
      %v468 = vand.u32 %v467, 4294901760
      %469 = vmatpush1.msra.mxu0 %v468
      %470 = vmatprep.subr.mxu0 0.0
      %v471 = vand.u32 %v239, 4294901760
      %v472 = vsub.f32 %v239, %v471
      %v473 = vand.u32 %v472, 4294901760
      %v474 = vsub.f32 %v472, %v473
      %v475 = vand.u32 %v474, 4294901760
      %476 = vmatpush1.msra.mxu0 %v475
      %477 = vmatprep.subr.mxu0 0.0
      %v478 = vand.u32 %v240, 4294901760
      %v479 = vsub.f32 %v240, %v478
      %v480 = vand.u32 %v479, 4294901760
      %v481 = vsub.f32 %v479, %v480
      %v482 = vand.u32 %v481, 4294901760
      %483 = vmatpush1.msra.mxu0 %v482
      %484 = vmatprep.subr.mxu0 0.0
      %v485 = vand.u32 %v241, 4294901760
      %v486 = vsub.f32 %v241, %v485
      %v487 = vand.u32 %v486, 4294901760
      %v488 = vsub.f32 %v486, %v487
      %v489 = vand.u32 %v488, 4294901760
      %490 = vmatpush1.msra.mxu0 %v489
      %491 = vmatprep.subr.mxu0 0.0
      %v492 = vand.u32 %v242, 4294901760
      %v493 = vsub.f32 %v242, %v492
      %v494 = vand.u32 %v493, 4294901760
      %v495 = vsub.f32 %v493, %v494
      %v496 = vand.u32 %v495, 4294901760
      %497 = vmatpush1.msra.mxu0 %v496
      %498 = vmatprep.subr.mxu0 0.0
      %v499 = vand.u32 %v243, 4294901760
      %v500 = vsub.f32 %v243, %v499
      %v501 = vand.u32 %v500, 4294901760
      %v502 = vsub.f32 %v500, %v501
      %v503 = vand.u32 %v502, 4294901760
      %504 = vmatpush1.msra.mxu0 %v503
      %505 = vmatprep.subr.mxu0 0.0
      %v506 = vand.u32 %v244, 4294901760
      %v507 = vsub.f32 %v244, %v506
      %v508 = vand.u32 %v507, 4294901760
      %v509 = vsub.f32 %v507, %v508
      %v510 = vand.u32 %v509, 4294901760
      %511 = vmatpush1.msra.mxu0 %v510
      %512 = vmatprep.subr.mxu0 0.0
      %v513 = vand.u32 %v245, 4294901760
      %v514 = vsub.f32 %v245, %v513
      %v515 = vand.u32 %v514, 4294901760
      %v516 = vsub.f32 %v514, %v515
      %v517 = vand.u32 %v516, 4294901760
      %518 = vmatpush1.msra.mxu0 %v517
      %519 = vmatprep.subr.mxu0 0.0
      %v520 = vand.u32 %v246, 4294901760
      %v521 = vsub.f32 %v246, %v520
      %v522 = vand.u32 %v521, 4294901760
      %v523 = vsub.f32 %v521, %v522
      %v524 = vand.u32 %v523, 4294901760
      %525 = vmatpush1.msra.mxu0 %v524
      %526 = vmatprep.subr.mxu0 0.0
      %v527 = vand.u32 %v247, 4294901760
      %v528 = vsub.f32 %v247, %v527
      %v529 = vand.u32 %v528, 4294901760
      %v530 = vsub.f32 %v528, %v529
      %v531 = vand.u32 %v530, 4294901760
      %532 = vmatpush1.msra.mxu0 %v531
      %533 = vmatprep.subr.mxu0 0.0
      %v534 = vand.u32 %v248, 4294901760
      %v535 = vsub.f32 %v248, %v534
      %v536 = vand.u32 %v535, 4294901760
      %v537 = vsub.f32 %v535, %v536
      %v538 = vand.u32 %v537, 4294901760
      %539 = vmatpush1.msra.mxu0 %v538
      %540 = vmatprep.subr.mxu0 0.0
      %v541 = vand.u32 %v249, 4294901760
      %v542 = vsub.f32 %v249, %v541
      %v543 = vand.u32 %v542, 4294901760
      %v544 = vsub.f32 %v542, %v543
      %v545 = vand.u32 %v544, 4294901760
      %546 = vmatpush1.msra.mxu0 %v545
      %547 = vmatprep.subr.mxu0 0.0
      %v548 = vand.u32 %v250, 4294901760
      %v549 = vsub.f32 %v250, %v548
      %v550 = vand.u32 %v549, 4294901760
      %v551 = vsub.f32 %v549, %v550
      %v552 = vand.u32 %v551, 4294901760
      %553 = vmatpush1.msra.mxu0 %v552
      %554 = vmatprep.subr.mxu0 0.0
      %v555 = vand.u32 %v251, 4294901760
      %v556 = vsub.f32 %v251, %v555
      %v557 = vand.u32 %v556, 4294901760
      %v558 = vsub.f32 %v556, %v557
      %v559 = vand.u32 %v558, 4294901760
      %560 = vmatpush1.msra.mxu0 %v559
      %561 = vmatprep.subr.mxu0 0.0
      %v562 = vand.u32 %v252, 4294901760
      %v563 = vsub.f32 %v252, %v562
      %v564 = vand.u32 %v563, 4294901760
      %v565 = vsub.f32 %v563, %v564
      %v566 = vand.u32 %v565, 4294901760
      %567 = vmatpush1.msra.mxu0 %v566
      %568 = vmatprep.subr.mxu0 0.0
      %v569 = vand.u32 %v253, 4294901760
      %v570 = vsub.f32 %v253, %v569
      %v571 = vand.u32 %v570, 4294901760
      %v572 = vsub.f32 %v570, %v571
      %v573 = vand.u32 %v572, 4294901760
      %574 = vmatpush1.msra.mxu0 %v573
      %575 = vmatprep.subr.mxu0 0.0
      %v576 = vand.u32 %v254, 4294901760
      %v577 = vsub.f32 %v254, %v576
      %v578 = vand.u32 %v577, 4294901760
      %v579 = vsub.f32 %v577, %v578
      %v580 = vand.u32 %v579, 4294901760
      %581 = vmatpush1.msra.mxu0 %v580
      %582 = vmatprep.subr.mxu0 0.0
      %v583 = vand.u32 %v255, 4294901760
      %v584 = vsub.f32 %v255, %v583
      %v585 = vand.u32 %v584, 4294901760
      %v586 = vsub.f32 %v584, %v585
      %v587 = vand.u32 %v586, 4294901760
      %588 = vmatpush1.msra.mxu0 %v587
      %589 = vmatprep.subr.mxu0 0.0
      %v590 = vand.u32 %v256, 4294901760
      %v591 = vsub.f32 %v256, %v590
      %v592 = vand.u32 %v591, 4294901760
      %v593 = vsub.f32 %v591, %v592
      %v594 = vand.u32 %v593, 4294901760
      %595 = vmatpush1.msra.mxu0 %v594
      %v596 = vand.u32 %v258, 4294901760
      %597 = vmatprep.mubr.f32.mxu0 %v596
      %v598 = vand.u32 %v224, 4294901760
      %599 = vmatmul.mubr.f32.gmra.mrb[0].mxu0 %v598
      %v600 = vpop.f32.mrb[0].mxu0
      %v601 = vadd.f32 %v369, %v600
      %v602 = vpop.f32.mrb[0].mxu0
      %603 = vdwg.mxu0
      %604 = vmatprep.subr.mxu0 0.0
      %v605 = vand.u32 %v225, 4294901760
      %v606 = vsub.f32 %v225, %v605
      %607 = vmatpush1.msra.mxu0 %v606
      %608 = vmatprep.subr.mxu0 0.0
      %v609 = vand.u32 %v226, 4294901760
      %v610 = vsub.f32 %v226, %v609
      %611 = vmatpush1.msra.mxu0 %v610
      %612 = vmatprep.subr.mxu0 0.0
      %v613 = vand.u32 %v227, 4294901760
      %v614 = vsub.f32 %v227, %v613
      %615 = vmatpush1.msra.mxu0 %v614
      %616 = vmatprep.subr.mxu0 0.0
      %v617 = vand.u32 %v228, 4294901760
      %v618 = vsub.f32 %v228, %v617
      %619 = vmatpush1.msra.mxu0 %v618
      %620 = vmatprep.subr.mxu0 0.0
      %v621 = vand.u32 %v229, 4294901760
      %v622 = vsub.f32 %v229, %v621
      %623 = vmatpush1.msra.mxu0 %v622
      %624 = vmatprep.subr.mxu0 0.0
      %v625 = vand.u32 %v230, 4294901760
      %v626 = vsub.f32 %v230, %v625
      %627 = vmatpush1.msra.mxu0 %v626
      %628 = vmatprep.subr.mxu0 0.0
      %v629 = vand.u32 %v231, 4294901760
      %v630 = vsub.f32 %v231, %v629
      %631 = vmatpush1.msra.mxu0 %v630
      %632 = vmatprep.subr.mxu0 0.0
      %v633 = vand.u32 %v232, 4294901760
      %v634 = vsub.f32 %v232, %v633
      %635 = vmatpush1.msra.mxu0 %v634
      %636 = vmatprep.subr.mxu0 0.0
      %v637 = vand.u32 %v233, 4294901760
      %v638 = vsub.f32 %v233, %v637
      %639 = vmatpush1.msra.mxu0 %v638
      %640 = vmatprep.subr.mxu0 0.0
      %v641 = vand.u32 %v234, 4294901760
      %v642 = vsub.f32 %v234, %v641
      %643 = vmatpush1.msra.mxu0 %v642
      %644 = vmatprep.subr.mxu0 0.0
      %v645 = vand.u32 %v235, 4294901760
      %v646 = vsub.f32 %v235, %v645
      %647 = vmatpush1.msra.mxu0 %v646
      %648 = vmatprep.subr.mxu0 0.0
      %v649 = vand.u32 %v236, 4294901760
      %v650 = vsub.f32 %v236, %v649
      %651 = vmatpush1.msra.mxu0 %v650
      %652 = vmatprep.subr.mxu0 0.0
      %v653 = vand.u32 %v237, 4294901760
      %v654 = vsub.f32 %v237, %v653
      %655 = vmatpush1.msra.mxu0 %v654
      %656 = vmatprep.subr.mxu0 0.0
      %v657 = vand.u32 %v238, 4294901760
      %v658 = vsub.f32 %v238, %v657
      %659 = vmatpush1.msra.mxu0 %v658
      %660 = vmatprep.subr.mxu0 0.0
      %v661 = vand.u32 %v239, 4294901760
      %v662 = vsub.f32 %v239, %v661
      %663 = vmatpush1.msra.mxu0 %v662
      %664 = vmatprep.subr.mxu0 0.0
      %v665 = vand.u32 %v240, 4294901760
      %v666 = vsub.f32 %v240, %v665
      %667 = vmatpush1.msra.mxu0 %v666
      %668 = vmatprep.subr.mxu0 0.0
      %v669 = vand.u32 %v241, 4294901760
      %v670 = vsub.f32 %v241, %v669
      %671 = vmatpush1.msra.mxu0 %v670
      %672 = vmatprep.subr.mxu0 0.0
      %v673 = vand.u32 %v242, 4294901760
      %v674 = vsub.f32 %v242, %v673
      %675 = vmatpush1.msra.mxu0 %v674
      %676 = vmatprep.subr.mxu0 0.0
      %v677 = vand.u32 %v243, 4294901760
      %v678 = vsub.f32 %v243, %v677
      %679 = vmatpush1.msra.mxu0 %v678
      %680 = vmatprep.subr.mxu0 0.0
      %v681 = vand.u32 %v244, 4294901760
      %v682 = vsub.f32 %v244, %v681
      %683 = vmatpush1.msra.mxu0 %v682
      %684 = vmatprep.subr.mxu0 0.0
      %v685 = vand.u32 %v245, 4294901760
      %v686 = vsub.f32 %v245, %v685
      %687 = vmatpush1.msra.mxu0 %v686
      %688 = vmatprep.subr.mxu0 0.0
      %v689 = vand.u32 %v246, 4294901760
      %v690 = vsub.f32 %v246, %v689
      %691 = vmatpush1.msra.mxu0 %v690
      %692 = vmatprep.subr.mxu0 0.0
      %v693 = vand.u32 %v247, 4294901760
      %v694 = vsub.f32 %v247, %v693
      %695 = vmatpush1.msra.mxu0 %v694
      %696 = vmatprep.subr.mxu0 0.0
      %v697 = vand.u32 %v248, 4294901760
      %v698 = vsub.f32 %v248, %v697
      %699 = vmatpush1.msra.mxu0 %v698
      %700 = vmatprep.subr.mxu0 0.0
      %v701 = vand.u32 %v249, 4294901760
      %v702 = vsub.f32 %v249, %v701
      %703 = vmatpush1.msra.mxu0 %v702
      %704 = vmatprep.subr.mxu0 0.0
      %v705 = vand.u32 %v250, 4294901760
      %v706 = vsub.f32 %v250, %v705
      %707 = vmatpush1.msra.mxu0 %v706
      %708 = vmatprep.subr.mxu0 0.0
      %v709 = vand.u32 %v251, 4294901760
      %v710 = vsub.f32 %v251, %v709
      %711 = vmatpush1.msra.mxu0 %v710
      %712 = vmatprep.subr.mxu0 0.0
      %v713 = vand.u32 %v252, 4294901760
      %v714 = vsub.f32 %v252, %v713
      %715 = vmatpush1.msra.mxu0 %v714
      %716 = vmatprep.subr.mxu0 0.0
      %v717 = vand.u32 %v253, 4294901760
      %v718 = vsub.f32 %v253, %v717
      %719 = vmatpush1.msra.mxu0 %v718
      %720 = vmatprep.subr.mxu0 0.0
      %v721 = vand.u32 %v254, 4294901760
      %v722 = vsub.f32 %v254, %v721
      %723 = vmatpush1.msra.mxu0 %v722
      %724 = vmatprep.subr.mxu0 0.0
      %v725 = vand.u32 %v255, 4294901760
      %v726 = vsub.f32 %v255, %v725
      %727 = vmatpush1.msra.mxu0 %v726
      %728 = vmatprep.subr.mxu0 0.0
      %v729 = vand.u32 %v256, 4294901760
      %v730 = vsub.f32 %v256, %v729
      %731 = vmatpush1.msra.mxu0 %v730
      %v732 = vand.u32 %v258, 4294901760
      %v733 = vsub.f32 %v258, %v732
      %734 = vmatprep.mubr.f32.mxu0 %v733
      %v735 = vand.u32 %v224, 4294901760
      %v736 = vsub.f32 %v224, %v735
      %737 = vmatmul.mubr.f32.gmra.mrb[0].mxu0 %v736
      %v738 = vpop.f32.mrb[0].mxu0
      %v739 = vadd.f32 %v601, %v738
      %v740 = vpop.f32.mrb[0].mxu0
      %741 = vdwg.mxu0
      %742 = vmatprep.subr.mxu0 0.0
      %v743 = vand.u32 %v225, 4294901760
      %744 = vmatpush1.msra.mxu0 %v743
      %745 = vmatprep.subr.mxu0 0.0
      %v746 = vand.u32 %v226, 4294901760
      %747 = vmatpush1.msra.mxu0 %v746
      %748 = vmatprep.subr.mxu0 0.0
      %v749 = vand.u32 %v227, 4294901760
      %750 = vmatpush1.msra.mxu0 %v749
      %751 = vmatprep.subr.mxu0 0.0
      %v752 = vand.u32 %v228, 4294901760
      %753 = vmatpush1.msra.mxu0 %v752
      %754 = vmatprep.subr.mxu0 0.0
      %v755 = vand.u32 %v229, 4294901760
      %756 = vmatpush1.msra.mxu0 %v755
      %757 = vmatprep.subr.mxu0 0.0
      %v758 = vand.u32 %v230, 4294901760
      %759 = vmatpush1.msra.mxu0 %v758
      %760 = vmatprep.subr.mxu0 0.0
      %v761 = vand.u32 %v231, 4294901760
      %762 = vmatpush1.msra.mxu0 %v761
      %763 = vmatprep.subr.mxu0 0.0
      %v764 = vand.u32 %v232, 4294901760
      %765 = vmatpush1.msra.mxu0 %v764
      %766 = vmatprep.subr.mxu0 0.0
      %v767 = vand.u32 %v233, 4294901760
      %768 = vmatpush1.msra.mxu0 %v767
      %769 = vmatprep.subr.mxu0 0.0
      %v770 = vand.u32 %v234, 4294901760
      %771 = vmatpush1.msra.mxu0 %v770
      %772 = vmatprep.subr.mxu0 0.0
      %v773 = vand.u32 %v235, 4294901760
      %774 = vmatpush1.msra.mxu0 %v773
      %775 = vmatprep.subr.mxu0 0.0
      %v776 = vand.u32 %v236, 4294901760
      %777 = vmatpush1.msra.mxu0 %v776
      %778 = vmatprep.subr.mxu0 0.0
      %v779 = vand.u32 %v237, 4294901760
      %780 = vmatpush1.msra.mxu0 %v779
      %781 = vmatprep.subr.mxu0 0.0
      %v782 = vand.u32 %v238, 4294901760
      %783 = vmatpush1.msra.mxu0 %v782
      %784 = vmatprep.subr.mxu0 0.0
      %v785 = vand.u32 %v239, 4294901760
      %786 = vmatpush1.msra.mxu0 %v785
      %787 = vmatprep.subr.mxu0 0.0
      %v788 = vand.u32 %v240, 4294901760
      %789 = vmatpush1.msra.mxu0 %v788
      %790 = vmatprep.subr.mxu0 0.0
      %v791 = vand.u32 %v241, 4294901760
      %792 = vmatpush1.msra.mxu0 %v791
      %793 = vmatprep.subr.mxu0 0.0
      %v794 = vand.u32 %v242, 4294901760
      %795 = vmatpush1.msra.mxu0 %v794
      %796 = vmatprep.subr.mxu0 0.0
      %v797 = vand.u32 %v243, 4294901760
      %798 = vmatpush1.msra.mxu0 %v797
      %799 = vmatprep.subr.mxu0 0.0
      %v800 = vand.u32 %v244, 4294901760
      %801 = vmatpush1.msra.mxu0 %v800
      %802 = vmatprep.subr.mxu0 0.0
      %v803 = vand.u32 %v245, 4294901760
      %804 = vmatpush1.msra.mxu0 %v803
      %805 = vmatprep.subr.mxu0 0.0
      %v806 = vand.u32 %v246, 4294901760
      %807 = vmatpush1.msra.mxu0 %v806
      %808 = vmatprep.subr.mxu0 0.0
      %v809 = vand.u32 %v247, 4294901760
      %810 = vmatpush1.msra.mxu0 %v809
      %811 = vmatprep.subr.mxu0 0.0
      %v812 = vand.u32 %v248, 4294901760
      %813 = vmatpush1.msra.mxu0 %v812
      %814 = vmatprep.subr.mxu0 0.0
      %v815 = vand.u32 %v249, 4294901760
      %816 = vmatpush1.msra.mxu0 %v815
      %817 = vmatprep.subr.mxu0 0.0
      %v818 = vand.u32 %v250, 4294901760
      %819 = vmatpush1.msra.mxu0 %v818
      %820 = vmatprep.subr.mxu0 0.0
      %v821 = vand.u32 %v251, 4294901760
      %822 = vmatpush1.msra.mxu0 %v821
      %823 = vmatprep.subr.mxu0 0.0
      %v824 = vand.u32 %v252, 4294901760
      %825 = vmatpush1.msra.mxu0 %v824
      %826 = vmatprep.subr.mxu0 0.0
      %v827 = vand.u32 %v253, 4294901760
      %828 = vmatpush1.msra.mxu0 %v827
      %829 = vmatprep.subr.mxu0 0.0
      %v830 = vand.u32 %v254, 4294901760
      %831 = vmatpush1.msra.mxu0 %v830
      %832 = vmatprep.subr.mxu0 0.0
      %v833 = vand.u32 %v255, 4294901760
      %834 = vmatpush1.msra.mxu0 %v833
      %835 = vmatprep.subr.mxu0 0.0
      %v836 = vand.u32 %v256, 4294901760
      %837 = vmatpush1.msra.mxu0 %v836
      %v838 = vand.u32 %v258, 4294901760
      %v839 = vsub.f32 %v258, %v838
      %v840 = vand.u32 %v839, 4294901760
      %841 = vmatprep.mubr.f32.mxu0 %v840
      %v842 = vand.u32 %v224, 4294901760
      %v843 = vsub.f32 %v224, %v842
      %v844 = vand.u32 %v843, 4294901760
      %845 = vmatmul.mubr.f32.gmra.mrb[0].mxu0 %v844
      %v846 = vpop.f32.mrb[0].mxu0
      %v847 = vadd.f32 %v739, %v846
      %v848 = vpop.f32.mrb[0].mxu0
      %849 = vdwg.mxu0
      %850 = vmatprep.subr.mxu0 0.0
      %v851 = vand.u32 %v225, 4294901760
      %v852 = vsub.f32 %v225, %v851
      %v853 = vand.u32 %v852, 4294901760
      %854 = vmatpush1.msra.mxu0 %v853
      %855 = vmatprep.subr.mxu0 0.0
      %v856 = vand.u32 %v226, 4294901760
      %v857 = vsub.f32 %v226, %v856
      %v858 = vand.u32 %v857, 4294901760
      %859 = vmatpush1.msra.mxu0 %v858
      %860 = vmatprep.subr.mxu0 0.0
      %v861 = vand.u32 %v227, 4294901760
      %v862 = vsub.f32 %v227, %v861
      %v863 = vand.u32 %v862, 4294901760
      %864 = vmatpush1.msra.mxu0 %v863
      %865 = vmatprep.subr.mxu0 0.0
      %v866 = vand.u32 %v228, 4294901760
      %v867 = vsub.f32 %v228, %v866
      %v868 = vand.u32 %v867, 4294901760
      %869 = vmatpush1.msra.mxu0 %v868
      %870 = vmatprep.subr.mxu0 0.0
      %v871 = vand.u32 %v229, 4294901760
      %v872 = vsub.f32 %v229, %v871
      %v873 = vand.u32 %v872, 4294901760
      %874 = vmatpush1.msra.mxu0 %v873
      %875 = vmatprep.subr.mxu0 0.0
      %v876 = vand.u32 %v230, 4294901760
      %v877 = vsub.f32 %v230, %v876
      %v878 = vand.u32 %v877, 4294901760
      %879 = vmatpush1.msra.mxu0 %v878
      %880 = vmatprep.subr.mxu0 0.0
      %v881 = vand.u32 %v231, 4294901760
      %v882 = vsub.f32 %v231, %v881
      %v883 = vand.u32 %v882, 4294901760
      %884 = vmatpush1.msra.mxu0 %v883
      %885 = vmatprep.subr.mxu0 0.0
      %v886 = vand.u32 %v232, 4294901760
      %v887 = vsub.f32 %v232, %v886
      %v888 = vand.u32 %v887, 4294901760
      %889 = vmatpush1.msra.mxu0 %v888
      %890 = vmatprep.subr.mxu0 0.0
      %v891 = vand.u32 %v233, 4294901760
      %v892 = vsub.f32 %v233, %v891
      %v893 = vand.u32 %v892, 4294901760
      %894 = vmatpush1.msra.mxu0 %v893
      %895 = vmatprep.subr.mxu0 0.0
      %v896 = vand.u32 %v234, 4294901760
      %v897 = vsub.f32 %v234, %v896
      %v898 = vand.u32 %v897, 4294901760
      %899 = vmatpush1.msra.mxu0 %v898
      %900 = vmatprep.subr.mxu0 0.0
      %v901 = vand.u32 %v235, 4294901760
      %v902 = vsub.f32 %v235, %v901
      %v903 = vand.u32 %v902, 4294901760
      %904 = vmatpush1.msra.mxu0 %v903
      %905 = vmatprep.subr.mxu0 0.0
      %v906 = vand.u32 %v236, 4294901760
      %v907 = vsub.f32 %v236, %v906
      %v908 = vand.u32 %v907, 4294901760
      %909 = vmatpush1.msra.mxu0 %v908
      %910 = vmatprep.subr.mxu0 0.0
      %v911 = vand.u32 %v237, 4294901760
      %v912 = vsub.f32 %v237, %v911
      %v913 = vand.u32 %v912, 4294901760
      %914 = vmatpush1.msra.mxu0 %v913
      %915 = vmatprep.subr.mxu0 0.0
      %v916 = vand.u32 %v238, 4294901760
      %v917 = vsub.f32 %v238, %v916
      %v918 = vand.u32 %v917, 4294901760
      %919 = vmatpush1.msra.mxu0 %v918
      %920 = vmatprep.subr.mxu0 0.0
      %v921 = vand.u32 %v239, 4294901760
      %v922 = vsub.f32 %v239, %v921
      %v923 = vand.u32 %v922, 4294901760
      %924 = vmatpush1.msra.mxu0 %v923
      %925 = vmatprep.subr.mxu0 0.0
      %v926 = vand.u32 %v240, 4294901760
      %v927 = vsub.f32 %v240, %v926
      %v928 = vand.u32 %v927, 4294901760
      %929 = vmatpush1.msra.mxu0 %v928
      %930 = vmatprep.subr.mxu0 0.0
      %v931 = vand.u32 %v241, 4294901760
      %v932 = vsub.f32 %v241, %v931
      %v933 = vand.u32 %v932, 4294901760
      %934 = vmatpush1.msra.mxu0 %v933
      %935 = vmatprep.subr.mxu0 0.0
      %v936 = vand.u32 %v242, 4294901760
      %v937 = vsub.f32 %v242, %v936
      %v938 = vand.u32 %v937, 4294901760
      %939 = vmatpush1.msra.mxu0 %v938
      %940 = vmatprep.subr.mxu0 0.0
      %v941 = vand.u32 %v243, 4294901760
      %v942 = vsub.f32 %v243, %v941
      %v943 = vand.u32 %v942, 4294901760
      %944 = vmatpush1.msra.mxu0 %v943
      %945 = vmatprep.subr.mxu0 0.0
      %v946 = vand.u32 %v244, 4294901760
      %v947 = vsub.f32 %v244, %v946
      %v948 = vand.u32 %v947, 4294901760
      %949 = vmatpush1.msra.mxu0 %v948
      %950 = vmatprep.subr.mxu0 0.0
      %v951 = vand.u32 %v245, 4294901760
      %v952 = vsub.f32 %v245, %v951
      %v953 = vand.u32 %v952, 4294901760
      %954 = vmatpush1.msra.mxu0 %v953
      %955 = vmatprep.subr.mxu0 0.0
      %v956 = vand.u32 %v246, 4294901760
      %v957 = vsub.f32 %v246, %v956
      %v958 = vand.u32 %v957, 4294901760
      %959 = vmatpush1.msra.mxu0 %v958
      %960 = vmatprep.subr.mxu0 0.0
      %v961 = vand.u32 %v247, 4294901760
      %v962 = vsub.f32 %v247, %v961
      %v963 = vand.u32 %v962, 4294901760
      %964 = vmatpush1.msra.mxu0 %v963
      %965 = vmatprep.subr.mxu0 0.0
      %v966 = vand.u32 %v248, 4294901760
      %v967 = vsub.f32 %v248, %v966
      %v968 = vand.u32 %v967, 4294901760
      %969 = vmatpush1.msra.mxu0 %v968
      %970 = vmatprep.subr.mxu0 0.0
      %v971 = vand.u32 %v249, 4294901760
      %v972 = vsub.f32 %v249, %v971
      %v973 = vand.u32 %v972, 4294901760
      %974 = vmatpush1.msra.mxu0 %v973
      %975 = vmatprep.subr.mxu0 0.0
      %v976 = vand.u32 %v250, 4294901760
      %v977 = vsub.f32 %v250, %v976
      %v978 = vand.u32 %v977, 4294901760
      %979 = vmatpush1.msra.mxu0 %v978
      %980 = vmatprep.subr.mxu0 0.0
      %v981 = vand.u32 %v251, 4294901760
      %v982 = vsub.f32 %v251, %v981
      %v983 = vand.u32 %v982, 4294901760
      %984 = vmatpush1.msra.mxu0 %v983
      %985 = vmatprep.subr.mxu0 0.0
      %v986 = vand.u32 %v252, 4294901760
      %v987 = vsub.f32 %v252, %v986
      %v988 = vand.u32 %v987, 4294901760
      %989 = vmatpush1.msra.mxu0 %v988
      %990 = vmatprep.subr.mxu0 0.0
      %v991 = vand.u32 %v253, 4294901760
      %v992 = vsub.f32 %v253, %v991
      %v993 = vand.u32 %v992, 4294901760
      %994 = vmatpush1.msra.mxu0 %v993
      %995 = vmatprep.subr.mxu0 0.0
      %v996 = vand.u32 %v254, 4294901760
      %v997 = vsub.f32 %v254, %v996
      %v998 = vand.u32 %v997, 4294901760
      %999 = vmatpush1.msra.mxu0 %v998
      %1000 = vmatprep.subr.mxu0 0.0
      %v1001 = vand.u32 %v255, 4294901760
      %v1002 = vsub.f32 %v255, %v1001
      %v1003 = vand.u32 %v1002, 4294901760
      %1004 = vmatpush1.msra.mxu0 %v1003
      %1005 = vmatprep.subr.mxu0 0.0
      %v1006 = vand.u32 %v256, 4294901760
      %v1007 = vsub.f32 %v256, %v1006
      %v1008 = vand.u32 %v1007, 4294901760
      %1009 = vmatpush1.msra.mxu0 %v1008
      %v1010 = vand.u32 %v258, 4294901760
      %1011 = vmatprep.mubr.f32.mxu0 %v1010
      %v1012 = vand.u32 %v224, 4294901760
      %1013 = vmatmul.mubr.f32.gmra.mrb[0].mxu0 %v1012
      %v1014 = vpop.f32.mrb[0].mxu0
      %v1015 = vadd.f32 %v847, %v1014
      %v1016 = vpop.f32.mrb[0].mxu0
      %1017 = vdwg.mxu0
      %1018 = vmatprep.subr.mxu0 0.0
      %v1019 = vand.u32 %v225, 4294901760
      %1020 = vmatpush1.msra.mxu0 %v1019
      %1021 = vmatprep.subr.mxu0 0.0
      %v1022 = vand.u32 %v226, 4294901760
      %1023 = vmatpush1.msra.mxu0 %v1022
      %1024 = vmatprep.subr.mxu0 0.0
      %v1025 = vand.u32 %v227, 4294901760
      %1026 = vmatpush1.msra.mxu0 %v1025
      %1027 = vmatprep.subr.mxu0 0.0
      %v1028 = vand.u32 %v228, 4294901760
      %1029 = vmatpush1.msra.mxu0 %v1028
      %1030 = vmatprep.subr.mxu0 0.0
      %v1031 = vand.u32 %v229, 4294901760
      %1032 = vmatpush1.msra.mxu0 %v1031
      %1033 = vmatprep.subr.mxu0 0.0
      %v1034 = vand.u32 %v230, 4294901760
      %1035 = vmatpush1.msra.mxu0 %v1034
      %1036 = vmatprep.subr.mxu0 0.0
      %v1037 = vand.u32 %v231, 4294901760
      %1038 = vmatpush1.msra.mxu0 %v1037
      %1039 = vmatprep.subr.mxu0 0.0
      %v1040 = vand.u32 %v232, 4294901760
      %1041 = vmatpush1.msra.mxu0 %v1040
      %1042 = vmatprep.subr.mxu0 0.0
      %v1043 = vand.u32 %v233, 4294901760
      %1044 = vmatpush1.msra.mxu0 %v1043
      %1045 = vmatprep.subr.mxu0 0.0
      %v1046 = vand.u32 %v234, 4294901760
      %1047 = vmatpush1.msra.mxu0 %v1046
      %1048 = vmatprep.subr.mxu0 0.0
      %v1049 = vand.u32 %v235, 4294901760
      %1050 = vmatpush1.msra.mxu0 %v1049
      %1051 = vmatprep.subr.mxu0 0.0
      %v1052 = vand.u32 %v236, 4294901760
      %1053 = vmatpush1.msra.mxu0 %v1052
      %1054 = vmatprep.subr.mxu0 0.0
      %v1055 = vand.u32 %v237, 4294901760
      %1056 = vmatpush1.msra.mxu0 %v1055
      %1057 = vmatprep.subr.mxu0 0.0
      %v1058 = vand.u32 %v238, 4294901760
      %1059 = vmatpush1.msra.mxu0 %v1058
      %1060 = vmatprep.subr.mxu0 0.0
      %v1061 = vand.u32 %v239, 4294901760
      %1062 = vmatpush1.msra.mxu0 %v1061
      %1063 = vmatprep.subr.mxu0 0.0
      %v1064 = vand.u32 %v240, 4294901760
      %1065 = vmatpush1.msra.mxu0 %v1064
      %1066 = vmatprep.subr.mxu0 0.0
      %v1067 = vand.u32 %v241, 4294901760
      %1068 = vmatpush1.msra.mxu0 %v1067
      %1069 = vmatprep.subr.mxu0 0.0
      %v1070 = vand.u32 %v242, 4294901760
      %1071 = vmatpush1.msra.mxu0 %v1070
      %1072 = vmatprep.subr.mxu0 0.0
      %v1073 = vand.u32 %v243, 4294901760
      %1074 = vmatpush1.msra.mxu0 %v1073
      %1075 = vmatprep.subr.mxu0 0.0
      %v1076 = vand.u32 %v244, 4294901760
      %1077 = vmatpush1.msra.mxu0 %v1076
      %1078 = vmatprep.subr.mxu0 0.0
      %v1079 = vand.u32 %v245, 4294901760
      %1080 = vmatpush1.msra.mxu0 %v1079
      %1081 = vmatprep.subr.mxu0 0.0
      %v1082 = vand.u32 %v246, 4294901760
      %1083 = vmatpush1.msra.mxu0 %v1082
      %1084 = vmatprep.subr.mxu0 0.0
      %v1085 = vand.u32 %v247, 4294901760
      %1086 = vmatpush1.msra.mxu0 %v1085
      %1087 = vmatprep.subr.mxu0 0.0
      %v1088 = vand.u32 %v248, 4294901760
      %1089 = vmatpush1.msra.mxu0 %v1088
      %1090 = vmatprep.subr.mxu0 0.0
      %v1091 = vand.u32 %v249, 4294901760
      %1092 = vmatpush1.msra.mxu0 %v1091
      %1093 = vmatprep.subr.mxu0 0.0
      %v1094 = vand.u32 %v250, 4294901760
      %1095 = vmatpush1.msra.mxu0 %v1094
      %1096 = vmatprep.subr.mxu0 0.0
      %v1097 = vand.u32 %v251, 4294901760
      %1098 = vmatpush1.msra.mxu0 %v1097
      %1099 = vmatprep.subr.mxu0 0.0
      %v1100 = vand.u32 %v252, 4294901760
      %1101 = vmatpush1.msra.mxu0 %v1100
      %1102 = vmatprep.subr.mxu0 0.0
      %v1103 = vand.u32 %v253, 4294901760
      %1104 = vmatpush1.msra.mxu0 %v1103
      %1105 = vmatprep.subr.mxu0 0.0
      %v1106 = vand.u32 %v254, 4294901760
      %1107 = vmatpush1.msra.mxu0 %v1106
      %1108 = vmatprep.subr.mxu0 0.0
      %v1109 = vand.u32 %v255, 4294901760
      %1110 = vmatpush1.msra.mxu0 %v1109
      %1111 = vmatprep.subr.mxu0 0.0
      %v1112 = vand.u32 %v256, 4294901760
      %1113 = vmatpush1.msra.mxu0 %v1112
      %v1114 = vand.u32 %v258, 4294901760
      %1115 = vmatprep.mubr.f32.mxu0 %v1114
      %v1116 = vand.u32 %v224, 4294901760
      %1117 = vmatmul.mubr.f32.gmra.mrb[0].mxu0 %v1116
      %v1118 = vpop.f32.mrb[0].mxu0
      %v1119 = vadd.f32 %v1015, %v1118
      %v1120 = vpop.f32.mrb[0].mxu0
      %1121 = vdwg.mxu0
      %v1122 = vrcp.pop %v1119
      %v1123 = vmul.f32 1.0, %v1122
      %1125 = vset.pattern.permute.xlu0 2
      %1126 = vperm.xlu0 %1125, %v1123
      %v1127 = vpop.permute.xlu0 %1126
      %v1129 = vmul.f32 %v1119, %v1127
      %vm1130 = vcmask 11264
      %1131 = vst.msk [vmem:[%s202] sm:$0xf] %vm1130, %v1129
      %p1132 = scmp.lt.s32.totalorder %s18, 1
      %s1133 = scalar_select %p1132, %s18, 1
      %p1134 = scmp.lt.s32.totalorder %s19, 0
      %s1135 = scalar_select %p1134, %s19, 0
      %s1136 = sadd.s32 %s1135, %s1133
      %s1137 = smul.addr %s1136, 4
      %s1138 = scalar_lea.vmem %s3, %s1137
      // Predicated region
      $region33: #{soft_argmax_2d.1} parent=31 // pred_check
        %p1139 = pneg %p116
      $region34: #{soft_argmax_2d.1} parent=31 // pred_check_branch
        %1141 = sbr.rel (%p1139) target = $region36
      $region35: #{soft_argmax_2d.1} parent=31 // pred_region
        _
      $region36: #{soft_argmax_2d.1} parent=31 // pred_fallthru
        _
    $region32: #{soft_argmax_2d.1} parent=5 // pred_fallthru
      _
    %p1142 = scmp.le.s32.totalorder 2, %s9
    // Predicated region
    $region37: #{soft_argmax_2d.1} parent=5 // pred_check
      %p1143 = pneg %p1142
    $region38: #{soft_argmax_2d.1} parent=5 // pred_check_branch
      %1145 = sbr.rel (%p1143) target = $region40
    $region39: #{soft_argmax_2d.1} parent=5 // pred_region
      %s1146 = ssub.s32 %s9, 2
      // Predicated region
      $region41: #{soft_argmax_2d.1} parent=39 // pred_check
        %p1147 = pneg %p122
      $region42: #{soft_argmax_2d.1} parent=39 // pred_check_branch
        %1149 = sbr.rel (%p1147) target = $region44
      $region43: #{soft_argmax_2d.1} parent=39 // pred_region
        %p1150 = scmp.lt.s32.totalorder %s20, 1
        %s1151 = scalar_select %p1150, %s20, 1
        %p1152 = scmp.lt.s32.totalorder %s21, 0
        %s1153 = scalar_select %p1152, %s21, 0
        %s1154 = sadd.s32 %s1153, %s1151
        %s1155 = smul.addr %s1154, 4
        %s1156 = scalar_lea.vmem %s3, %s1155
      $region44: #{soft_argmax_2d.1} parent=39 // pred_fallthru
        _
    $region40: #{soft_argmax_2d.1} parent=5 // pred_fallthru
      _
  $region6: #{soft_argmax_2d.1} parent=0 // loop_footer
    %s13 = sadd.s32 1, %s9
  $region7: #{soft_argmax_2d.1} parent=0 // loop_footer_branch
    %8 = sbr.rel target = $region3
  $region8: #{soft_argmax_2d.1} parent=0 // loop_exit
    _

</llo_original>
